<compile_context>
chip_gen: v6e
topology: v6e:2x2x1
jax: 0.10.0
libtpu: 0.0.40
codegen_flags: <defaults>
</compile_context>

<pallas_src>
import functools

import jax
import jax.numpy as jnp
import numpy as np
from jax.experimental import pallas as pl
from jax.experimental.pallas import tpu as pltpu

LANE = 128                      # TPU lane width
SUBLANE = 8                     # sublane group
DEFAULT_BLOCK_BYTES = 4 << 20   # steady-state tile (~1.3-5 us of HBM time per block)
#   whole-slab residency threshold = 2 * DEFAULT_BLOCK_BYTES (see _choose_layout)


# ------------------------------ fused kernel ------------------------------- #

def _fused_kernel(x_ref, o_ref, rmin_ref, rmax_ref,
                  min_acc, max_acc, params,
                  *, qmin, qmax, block_rows, cols, acc_dtype, valid_rows):
    """Fused 2-pass kernel. grid = (2, n_blocks); pass axis (p) is the outer axis."""
    p = pl.program_id(0)
    i = pl.program_id(1)
    n_blocks = pl.num_programs(1)
    fold = (block_rows % SUBLANE == 0) and (block_rows > SUBLANE)

    # ------------- pass 0: block-local min/max into a tiny accumulator -------------
    @pl.when(jnp.logical_and(p == 0, i == 0))
    def _():
        min_acc[...] = jnp.full(min_acc.shape, jnp.inf, dtype=min_acc.dtype)
        max_acc[...] = jnp.full(max_acc.shape, -jnp.inf, dtype=max_acc.dtype)

    @pl.when(p == 0)
    def _():
        xb = x_ref[...].astype(acc_dtype)
        if valid_rows is not None:
            # Ragged block grid: rows past the logical end hold garbage -> mask them
            # explicitly (never rely on OOB padding values for the reduction).
            rid = jax.lax.broadcasted_iota(jnp.int32, (block_rows, cols), 0) \
                + i * block_rows
            ok = rid < valid_rows
            x_min = jnp.where(ok, xb, float("inf"))
            x_max = jnp.where(ok, xb, -float("inf"))
        else:
            x_min = x_max = xb
        if fold:
            # Pure-VPU sublane-group fold: (block_rows, cols) -> (8, cols); only the
            # small accumulator is re-read/re-written per block (keeps pass 0 off the
            # vld/vst slot ceiling and frees VMEM for bigger blocks).
            x_min = jnp.min(x_min.reshape(block_rows // SUBLANE, SUBLANE, cols), axis=0)
            x_max = jnp.max(x_max.reshape(block_rows // SUBLANE, SUBLANE, cols), axis=0)
        min_acc[...] = jnp.minimum(min_acc[...], x_min)
        max_acc[...] = jnp.maximum(max_acc[...], x_max)

    # --- end of pass 0: one small cross-lane reduce + scalar quantization params ---
    @pl.when(jnp.logical_and(p == 0, i == n_blocks - 1))
    def _():
        mn = jnp.minimum(jnp.min(min_acc[...].astype(jnp.float32)), 0.0)  # include 0
        mx = jnp.maximum(jnp.max(max_acc[...].astype(jnp.float32)), 0.0)
        degenerate = jnp.logical_and(mn == 0.0, mx == 0.0)
        scale = (mx - mn) / (qmax - qmin)
        safe_scale = jnp.where(degenerate, 1.0, scale)
        zp = jnp.clip(jnp.round(qmin - mn / safe_scale), qmin, qmax)
        params[0] = jnp.where(degenerate, 0.0, scale)
        params[1] = jnp.where(degenerate, 0.0, zp)
        params[2] = jnp.where(degenerate, 0.0, 1.0 / safe_scale)
        rmin_ref[0, 0] = mn
        rmax_ref[0, 0] = mx

    # ---------- pass 1: fake quantize -> clamp -> dequantize (HBM-bound) -----------
    @pl.when(p == 1)
    def _():
        scale = params[0]
        zp = params[1]
        recip = params[2]          # 0 when degenerate -> output is exactly zero
        xb = x_ref[...].astype(jnp.float32)
        q = jnp.clip(jnp.round(xb * recip) + zp, qmin, qmax)
        o_ref[...] = ((q - zp) * scale).astype(o_ref.dtype)


# ---------------------- split (megacore-friendly) kernels ------------------- #

def _split_minmax_kernel(x_ref, pmin_ref, pmax_ref,
                         *, block_rows, cols, acc_dtype, valid_rows):
    """Per-block partial min/max; grid axis is fully data-parallel."""
    i = pl.program_id(0)
    xb = x_ref[...].astype(acc_dtype)
    if valid_rows is not None:
        rid = jax.lax.broadcasted_iota(jnp.int32, (block_rows, cols), 0) + i * block_rows
        ok = rid < valid_rows
        x_min = jnp.where(ok, xb, float("inf"))
        x_max = jnp.where(ok, xb, -float("inf"))
    else:
        x_min = x_max = xb
    if block_rows % SUBLANE == 0 and block_rows > SUBLANE:
        x_min = jnp.min(x_min.reshape(block_rows // SUBLANE, SUBLANE, cols), axis=0)
        x_max = jnp.max(x_max.reshape(block_rows // SUBLANE, SUBLANE, cols), axis=0)
    bmin = jnp.min(x_min).astype(jnp.float32)
    bmax = jnp.max(x_max).astype(jnp.float32)
    pmin_ref[...] = jnp.broadcast_to(bmin, pmin_ref.shape)
    pmax_ref[...] = jnp.broadcast_to(bmax, pmax_ref.shape)


def _split_apply_kernel(gmin_ref, gmax_ref, x_ref, o_ref, *, qmin, qmax):
    """Elementwise fake quant/dequant; scalar params rederived from the resident
    4 KiB global min/max tiles (trivial work, hidden under the block DMA)."""
    mn = jnp.minimum(jnp.min(gmin_ref[...]), 0.0)
    mx = jnp.maximum(jnp.max(gmax_ref[...]), 0.0)
    degenerate = jnp.logical_and(mn == 0.0, mx == 0.0)
    scale = (mx - mn) / (qmax - qmin)
    safe_scale = jnp.where(degenerate, 1.0, scale)
    zp = jnp.clip(jnp.round(qmin - mn / safe_scale), qmin, qmax)
    recip = jnp.where(degenerate, 0.0, 1.0 / safe_scale)
    scale = jnp.where(degenerate, 0.0, scale)
    zp = jnp.where(degenerate, 0.0, zp)
    xb = x_ref[...].astype(jnp.float32)
    q = jnp.clip(jnp.round(xb * recip) + zp, qmin, qmax)
    o_ref[...] = ((q - zp) * scale).astype(o_ref.dtype)


# ------------------------------ JAX glue code ------------------------------ #

def _tensorcores_per_device():
    """Best-effort count of TensorCores behind one JAX device (megacore / v7x)."""
    try:
        kind = jax.devices()[0].device_kind.lower()
    except Exception:
        return 1
    return 2 if any(tag in kind for tag in ("v4", "v5p", "7x")) else 1


def _choose_layout(total, itemsize, block_bytes):
    """Pick a lane-dense (rows, cols) slab and a sublane-blocked row tiling."""
    # Widest cols (multiple of 128, up to 1024) that divides the element count so the
    # wrapper never has to materialize a padded copy of the input / sliced output.
    cols = 0
    for c in (8 * LANE, 4 * LANE, 2 * LANE, LANE):
        if total % c == 0:
            cols = c
            break
    if cols == 0:
        # TODO(synk): a ragged tail (total not a multiple of 128) still takes a
        # wrapper zero-pad copy; the zero fill is safe only because the quantization
        # range is clamped to include 0.
        cols = LANE if total >= LANE else total
    rows = -(-total // cols)
    pad = rows * cols - total

    slab_bytes = rows * cols * itemsize
    resident_bytes = 2 * block_bytes
    nice_rows = rows <= SUBLANE or rows % SUBLANE == 0
    if slab_bytes <= resident_bytes and nice_rows:
        # Single resident block: identical input block index in both passes of the
        # fused kernel -> the input is DMA'd from HBM exactly once (2x bytes total).
        block_rows = rows
    else:
        block_rows = max(SUBLANE,
                         min(block_bytes // (cols * itemsize), rows)
                         // SUBLANE * SUBLANE)
    n_blocks = -(-rows // block_rows)
    return cols, rows, pad, block_rows, n_blocks


def _run_fused(x2d, *, rows, cols, block_rows, n_blocks, acc_rows, acc_dtype,
               qmin, qmax, valid_rows, vmem_limit, total, itemsize):
    kernel = functools.partial(
        _fused_kernel, qmin=qmin, qmax=qmax, block_rows=block_rows, cols=cols,
        acc_dtype=acc_dtype, valid_rows=valid_rows)
    out2d, rmin, rmax = pl.pallas_call(
        kernel,
        out_shape=(jax.ShapeDtypeStruct((rows, cols), x2d.dtype),
                   jax.ShapeDtypeStruct((1, 1), jnp.float32),
                   jax.ShapeDtypeStruct((1, 1), jnp.float32)),
        grid_spec=pltpu.PrefetchScalarGridSpec(
            num_scalar_prefetch=0,
            grid=(2, n_blocks),
            in_specs=[pl.BlockSpec((block_rows, cols), lambda p, i: (i, 0))],
            out_specs=(
                # (p*i, 0): constant block index during pass 0 -> the (uninitialized)
                # output buffer is never flushed early; each output block is written
                # exactly once, during pass 1.
                pl.BlockSpec((block_rows, cols), lambda p, i: (p * i, 0)),
                pl.BlockSpec(memory_space=pltpu.MemorySpace.SMEM),
                pl.BlockSpec(memory_space=pltpu.MemorySpace.SMEM)),
            scratch_shapes=[
                pltpu.VMEM((acc_rows, cols), acc_dtype),   # folded running min
                pltpu.VMEM((acc_rows, cols), acc_dtype),   # folded running max
                pltpu.SMEM((3,), jnp.float32),             # [scale, zero_point, recip]
            ]),
        compiler_params=pltpu.CompilerParams(
            # Both axes MUST stay "arbitrary": pass 1 consumes SMEM scalars written at
            # the end of pass 0, which relies on strictly sequential grid execution.
            dimension_semantics=("arbitrary", "arbitrary"),
            vmem_limit_bytes=vmem_limit),
        cost_estimate=pl.CostEstimate(
            flops=8 * total, transcendentals=0,
            bytes_accessed=3 * total * itemsize),
    )(x2d)
    return out2d, rmin[0, 0], rmax[0, 0]


def _run_split(x2d, *, rows, cols, block_rows, n_blocks, acc_dtype,
               qmin, qmax, valid_rows, vmem_limit, total, itemsize):
    # Pass A: per-block partial min/max, block axis "parallel" (both TensorCores on
    # v7x / megacore chips contribute HBM bandwidth).
    reduce_kernel = functools.partial(
        _split_minmax_kernel, block_rows=block_rows, cols=cols,
        acc_dtype=acc_dtype, valid_rows=valid_rows)
    pmin, pmax = pl.pallas_call(
        reduce_kernel,
        out_shape=(jax.ShapeDtypeStruct((SUBLANE, n_blocks * LANE), jnp.float32),
                   jax.ShapeDtypeStruct((SUBLANE, n_blocks * LANE), jnp.float32)),
        grid_spec=pltpu.PrefetchScalarGridSpec(
            num_scalar_prefetch=0,
            grid=(n_blocks,),
            in_specs=[pl.BlockSpec((block_rows, cols), lambda i: (i, 0))],
            out_specs=(pl.BlockSpec((SUBLANE, LANE), lambda i: (0, i)),
                       pl.BlockSpec((SUBLANE, LANE), lambda i: (0, i)))),
        compiler_params=pltpu.CompilerParams(
            dimension_semantics=("parallel",),
            vmem_limit_bytes=vmem_limit),
        cost_estimate=pl.CostEstimate(
            flops=2 * total, transcendentals=0,
            bytes_accessed=total * itemsize),
    )(x2d)

    # Tiny cross-block combine (XLA): (8, n_blocks*128) -> (8, 128) partials.
    gmin = jnp.min(pmin.reshape(SUBLANE, n_blocks, LANE), axis=1)
    gmax = jnp.max(pmax.reshape(SUBLANE, n_blocks, LANE), axis=1)
    rmin = jnp.minimum(jnp.min(gmin), 0.0)
    rmax = jnp.maximum(jnp.max(gmax), 0.0)

    # Pass B: elementwise fake quant/dequant, fully "parallel"; the 4 KiB gmin/gmax
    # tiles ride along as resident VMEM inputs (constant block index).
    apply_kernel = functools.partial(_split_apply_kernel, qmin=qmin, qmax=qmax)
    out2d = pl.pallas_call(
        apply_kernel,
        out_shape=jax.ShapeDtypeStruct((rows, cols), x2d.dtype),
        grid_spec=pltpu.PrefetchScalarGridSpec(
            num_scalar_prefetch=0,
            grid=(n_blocks,),
            in_specs=[pl.BlockSpec((SUBLANE, LANE), lambda i: (0, 0)),
                      pl.BlockSpec((SUBLANE, LANE), lambda i: (0, 0)),
                      pl.BlockSpec((block_rows, cols), lambda i: (i, 0))],
            out_specs=pl.BlockSpec((block_rows, cols), lambda i: (i, 0))),
        compiler_params=pltpu.CompilerParams(
            dimension_semantics=("parallel",),
            vmem_limit_bytes=vmem_limit),
        cost_estimate=pl.CostEstimate(
            flops=6 * total, transcendentals=0,
            bytes_accessed=2 * total * itemsize),
    )(gmin, gmax, x2d)
    return out2d, rmin, rmax


@functools.partial(jax.jit, static_argnames=("num_bits", "block_bytes", "split"))
def quantize_affine_forward(x, num_bits=8, block_bytes=None, split=None):
    """QuantizeAffine.forward at the first active training iteration.

    Returns (output, new_running_min, new_running_max).
    `block_bytes` / `split` are test/tuning overrides (None -> auto).
    """
    # TODO(synk): the PyTorch NaN / divergence validation (_validate_tensor) raises
    # host-side exceptions and has no clean in-kernel equivalent; NaNs propagate.
    if block_bytes is None:
        block_bytes = DEFAULT_BLOCK_BYTES
    total = int(np.prod(x.shape))
    itemsize = int(np.dtype(x.dtype).itemsize)
    cols, rows, pad, block_rows, n_blocks = _choose_layout(total, itemsize, block_bytes)
    ragged = (rows % block_rows) != 0
    valid_rows = rows if ragged else None
    acc_dtype = jnp.bfloat16 if x.dtype == jnp.dtype(jnp.bfloat16) else jnp.float32
    acc_rows = SUBLANE if (block_rows % SUBLANE == 0 and block_rows > SUBLANE) \
        else block_rows

    flat = x.reshape(-1)                 # native dtype; cast happens inside the kernel
    if pad:
        # Rare fallback (total not a multiple of 128). Zero padding is safe ONLY
        # because the quantization range is clamped to include 0.
        flat = jnp.pad(flat, (0, pad))
    x2d = flat.reshape(rows, cols)

    qmin = float(-(2 ** (num_bits - 1)))
    qmax = float(2 ** (num_bits - 1) - 1)

    # Explicit scoped-VMEM budget sized from the real footprint (double-buffered in +
    # out blocks + accumulators + headroom); always well under v7x's 64 MiB physical.
    blk_bytes = block_rows * cols * itemsize
    acc_bytes = 2 * acc_rows * cols * int(np.dtype(acc_dtype).itemsize)
    vmem_limit = int(min(max(4 * blk_bytes + acc_bytes + (8 << 20), 16 << 20),
                         48 << 20))

    if split is None:
        split = n_blocks >= 2 and _tensorcores_per_device() >= 2
    split = (split and n_blocks >= 2
             and block_rows % SUBLANE == 0 and cols % LANE == 0)

    common = dict(rows=rows, cols=cols, block_rows=block_rows, n_blocks=n_blocks,
                  acc_dtype=acc_dtype, qmin=qmin, qmax=qmax, valid_rows=valid_rows,
                  vmem_limit=vmem_limit, total=total, itemsize=itemsize)
    if split:
        out2d, rmin, rmax = _run_split(x2d, **common)
    else:
        out2d, rmin, rmax = _run_fused(x2d, acc_rows=acc_rows, **common)

    out_flat = out2d.reshape(-1)
    if pad:
        out_flat = out_flat[:total]
    return out_flat.reshape(x.shape), rmin, rmax


# ------------------------------ reference impl ----------------------------- #

def _reference(x, num_bits=8):
    xf = np.asarray(x, dtype=np.float32)
    rmin = np.float32(min(float(xf.min()), 0.0))
    rmax = np.float32(max(float(xf.max()), 0.0))
    qmin, qmax = -(2 ** (num_bits - 1)), 2 ** (num_bits - 1) - 1
    if rmin == 0.0 and rmax == 0.0:
        return np.zeros_like(xf), float(rmin), float(rmax)
    scale = np.float32((rmax - rmin) / np.float32(qmax - qmin))
    zp = np.float32(np.clip(np.round(np.float32(qmin) - rmin / scale), qmin, qmax))
    recip = np.float32(1.0) / scale
    q = np.clip(np.round(xf * recip) + zp, qmin, qmax)
    return ((q - zp) * scale).astype(np.float32), float(rmin), float(rmax)


def _check(out, mn, mx, x, num_bits=8):
    ref_out, ref_min, ref_max = _reference(np.asarray(x), num_bits)
    np.testing.assert_allclose(np.asarray(out), ref_out, rtol=1e-5, atol=1e-5)
    np.testing.assert_allclose(float(mn), ref_min, rtol=1e-6, atol=1e-6)
    np.testing.assert_allclose(float(mx), ref_max, rtol=1e-6, atol=1e-6)


# ---------------------------------- main ----------------------------------- #

if __name__ == "__main__":
    key = jax.random.PRNGKey(0)
    k1, k2, k3 = jax.random.split(key, 3)

    # 1) Fused single-resident-block fast path (typical small NCHW activation).
    x1 = jax.random.normal(k1, (2, 4, 16, 16), dtype=jnp.float32) * 3.0
    out1, mn1, mx1 = quantize_affine_forward(x1, num_bits=8)
    out1 = jax.block_until_ready(out1)
    _check(out1, mn1, mx1, x1)

    # 2) Split (megacore-friendly) two-call path, forced at a tiny block size so it
    #    is exercised even on single-TensorCore chips.
    x2 = jax.random.normal(k2, (4, 8, 32, 32), dtype=jnp.float32) * 2.0 + 0.5
    out2, mn2, mx2 = quantize_affine_forward(x2, num_bits=8,
                                             block_bytes=32 * 1024, split=True)
    out2 = jax.block_until_ready(out2)
    _check(out2, mn2, mx2, x2)

    # 3) Fused multi-block path with a ragged (non-divisible) last block, exercising
    #    the in-kernel +/-inf row masking and dropped OOB stores.
    x3 = jax.random.normal(k3, (2, 4, 40, 40), dtype=jnp.float32) * 1.5 - 0.25
    out3, mn3, mx3 = quantize_affine_forward(x3, num_bits=8,
                                             block_bytes=16 * 1024, split=False)
    out3 = jax.block_until_ready(out3)
    _check(out3, mn3, mx3, x3)

    print("KERNEL_OK")
</pallas_src>

<mosaic_0001>
module attributes {stable_mosaic.version = 11 : i64} {
  func.func @_fused_kernel(%arg0: i32, %arg1: i32, %arg2: memref<2x1024xf32, #tpu.memory_space<vmem>>, %arg3: memref<2x1024xf32, #tpu.memory_space<vmem>>, %arg4: memref<1x1xf32, #tpu.memory_space<smem>>, %arg5: memref<1x1xf32, #tpu.memory_space<smem>>, %arg6: memref<2x1024xf32, #tpu.memory_space<vmem>>, %arg7: memref<2x1024xf32, #tpu.memory_space<vmem>>, %arg8: memref<3xf32, #tpu.memory_space<smem>>) attributes {dimension_semantics = [#tpu.dimension_semantics<arbitrary>, #tpu.dimension_semantics<arbitrary>], iteration_bounds = array<i64: 2, 1>, scalar_prefetch = 0 : i64, scratch_operands = 3 : i64, tpu.core_type = #tpu.core_type<tc>, window_params = [{transform_indices = @transform_0, window_bounds = array<i64: 2, 1024>}, {transform_indices = @transform_1, window_bounds = array<i64: 2, 1024>}, {transform_indices = @transform_2, window_bounds = array<i64: 1, 1>}, {transform_indices = @transform_3, window_bounds = array<i64: 1, 1>}]} {
    %c0_i32 = arith.constant 0 : i32
    %0 = arith.cmpi eq, %arg0, %c0_i32 : i32
    %c0_i32_0 = arith.constant 0 : i32
    %1 = arith.cmpi eq, %arg1, %c0_i32_0 : i32
    %2 = arith.andi %0, %1 : i1
    %3 = arith.extui %2 : i1 to i32
    %c0_i32_1 = arith.constant 0 : i32
    %4 = arith.cmpi ne, %3, %c0_i32_1 : i32
    scf.if %4 {
      %cst = arith.constant 0x7F800000 : f32
      %16 = vector.broadcast %cst : f32 to vector<2x1024xf32>
      %c0 = arith.constant 0 : index
      %c0_8 = arith.constant 0 : index
      %17 = vector.load %arg6[%c0, %c0_8] : memref<2x1024xf32, #tpu.memory_space<vmem>>, vector<2x1024xf32>
      tpu.vector_store %arg6[%c0, %c0_8], %16 {strides = array<i32>} : memref<2x1024xf32, #tpu.memory_space<vmem>>, vector<2x1024xf32>,
      %cst_9 = arith.constant 0xFF800000 : f32
      %18 = vector.broadcast %cst_9 : f32 to vector<2x1024xf32>
      %c0_10 = arith.constant 0 : index
      %c0_11 = arith.constant 0 : index
      %19 = vector.load %arg7[%c0_10, %c0_11] : memref<2x1024xf32, #tpu.memory_space<vmem>>, vector<2x1024xf32>
      tpu.vector_store %arg7[%c0_10, %c0_11], %18 {strides = array<i32>} : memref<2x1024xf32, #tpu.memory_space<vmem>>, vector<2x1024xf32>,
    } else {
    }
    %c0_i32_2 = arith.constant 0 : i32
    %5 = arith.cmpi eq, %arg0, %c0_i32_2 : i32
    %6 = arith.extui %5 : i1 to i32
    %c0_i32_3 = arith.constant 0 : i32
    %7 = arith.cmpi ne, %6, %c0_i32_3 : i32
    scf.if %7 {
      %c0 = arith.constant 0 : index
      %c0_8 = arith.constant 0 : index
      %16 = vector.load %arg2[%c0, %c0_8] : memref<2x1024xf32, #tpu.memory_space<vmem>>, vector<2x1024xf32>
      %c0_9 = arith.constant 0 : index
      %c0_10 = arith.constant 0 : index
      %17 = vector.load %arg6[%c0_9, %c0_10] : memref<2x1024xf32, #tpu.memory_space<vmem>>, vector<2x1024xf32>
      %18 = arith.minimumf %17, %16 : vector<2x1024xf32>
      %c0_11 = arith.constant 0 : index
      %c0_12 = arith.constant 0 : index
      %19 = vector.load %arg6[%c0_11, %c0_12] : memref<2x1024xf32, #tpu.memory_space<vmem>>, vector<2x1024xf32>
      tpu.vector_store %arg6[%c0_11, %c0_12], %18 {strides = array<i32>} : memref<2x1024xf32, #tpu.memory_space<vmem>>, vector<2x1024xf32>,
      %c0_13 = arith.constant 0 : index
      %c0_14 = arith.constant 0 : index
      %20 = vector.load %arg7[%c0_13, %c0_14] : memref<2x1024xf32, #tpu.memory_space<vmem>>, vector<2x1024xf32>
      %21 = arith.maximumf %20, %16 : vector<2x1024xf32>
      %c0_15 = arith.constant 0 : index
      %c0_16 = arith.constant 0 : index
      %22 = vector.load %arg7[%c0_15, %c0_16] : memref<2x1024xf32, #tpu.memory_space<vmem>>, vector<2x1024xf32>
      tpu.vector_store %arg7[%c0_15, %c0_16], %21 {strides = array<i32>} : memref<2x1024xf32, #tpu.memory_space<vmem>>, vector<2x1024xf32>,
    } else {
    }
    %c0_i32_4 = arith.constant 0 : i32
    %8 = arith.cmpi eq, %arg0, %c0_i32_4 : i32
    %c0_i32_5 = arith.constant 0 : i32
    %9 = arith.cmpi eq, %arg1, %c0_i32_5 : i32
    %10 = arith.andi %8, %9 : i1
    %11 = arith.extui %10 : i1 to i32
    %c0_i32_6 = arith.constant 0 : i32
    %12 = arith.cmpi ne, %11, %c0_i32_6 : i32
    scf.if %12 {
      %c0 = arith.constant 0 : index
      %c0_8 = arith.constant 0 : index
      %16 = vector.load %arg6[%c0, %c0_8] : memref<2x1024xf32, #tpu.memory_space<vmem>>, vector<2x1024xf32>
      %17 = vector.shape_cast %16 : vector<2x1024xf32> to vector<1x2x1024xf32>
      %cst = arith.constant dense<0x7F800000> : vector<1xf32>
      %18 = vector.multi_reduction <minimumf>, %17, %cst [1, 2] : vector<1x2x1024xf32> to vector<1xf32>
      %19 = vector.shape_cast %18 : vector<1xf32> to vector<1x1x1xf32>
      %20 = vector.extract %19[0, 0, 0] : f32 from vector<1x1x1xf32>
      %cst_9 = arith.constant 0.000000e+00 : f32
      %21 = arith.minimumf %20, %cst_9 : f32
      %c0_10 = arith.constant 0 : index
      %c0_11 = arith.constant 0 : index
      %22 = vector.load %arg7[%c0_10, %c0_11] : memref<2x1024xf32, #tpu.memory_space<vmem>>, vector<2x1024xf32>
      %23 = vector.shape_cast %22 : vector<2x1024xf32> to vector<1x2x1024xf32>
      %cst_12 = arith.constant dense<0xFF800000> : vector<1xf32>
      %24 = vector.multi_reduction <maximumf>, %23, %cst_12 [1, 2] : vector<1x2x1024xf32> to vector<1xf32>
      %25 = vector.shape_cast %24 : vector<1xf32> to vector<1x1x1xf32>
      %26 = vector.extract %25[0, 0, 0] : f32 from vector<1x1x1xf32>
      %cst_13 = arith.constant 0.000000e+00 : f32
      %27 = arith.maximumf %26, %cst_13 : f32
      %cst_14 = arith.constant 0.000000e+00 : f32
      %28 = arith.cmpf oeq, %21, %cst_14 : f32
      %cst_15 = arith.constant 0.000000e+00 : f32
      %29 = arith.cmpf oeq, %27, %cst_15 : f32
      %30 = arith.andi %28, %29 : i1
      %31 = arith.subf %27, %21 : f32
      %cst_16 = arith.constant 2.550000e+02 : f32
      %32 = arith.divf %31, %cst_16 : f32
      %cst_17 = arith.constant 1.000000e+00 : f32
      %33 = arith.select %30, %cst_17, %32 : f32
      %34 = arith.divf %21, %33 : f32
      %cst_18 = arith.constant -1.280000e+02 : f32
      %35 = arith.subf %cst_18, %34 : f32
      %36 = math.roundeven %35 : f32
      %cst_19 = arith.constant -1.280000e+02 : f32
      %cst_20 = arith.constant 1.270000e+02 : f32
      %37 = arith.maximumf %cst_19, %36 : f32
      %38 = arith.minimumf %cst_20, %37 : f32
      %cst_21 = arith.constant 0.000000e+00 : f32
      %39 = arith.select %30, %cst_21, %32 : f32
      %c0_22 = arith.constant 0 : index
      %40 = memref.load %arg8[%c0_22] : memref<3xf32, #tpu.memory_space<smem>>
      memref.store %39, %arg8[%c0_22] : memref<3xf32, #tpu.memory_space<smem>>
      %cst_23 = arith.constant 0.000000e+00 : f32
      %41 = arith.select %30, %cst_23, %38 : f32
      %c1 = arith.constant 1 : index
      %42 = memref.load %arg8[%c1] : memref<3xf32, #tpu.memory_space<smem>>
      memref.store %41, %arg8[%c1] : memref<3xf32, #tpu.memory_space<smem>>
      %cst_24 = arith.constant 1.000000e+00 : f32
      %43 = arith.divf %cst_24, %33 : f32
      %cst_25 = arith.constant 0.000000e+00 : f32
      %44 = arith.select %30, %cst_25, %43 : f32
      %c2 = arith.constant 2 : index
      %45 = memref.load %arg8[%c2] : memref<3xf32, #tpu.memory_space<smem>>
      memref.store %44, %arg8[%c2] : memref<3xf32, #tpu.memory_space<smem>>
      %c0_26 = arith.constant 0 : index
      %c0_27 = arith.constant 0 : index
      %46 = memref.load %arg4[%c0_26, %c0_27] : memref<1x1xf32, #tpu.memory_space<smem>>
      memref.store %21, %arg4[%c0_26, %c0_27] : memref<1x1xf32, #tpu.memory_space<smem>>
      %c0_28 = arith.constant 0 : index
      %c0_29 = arith.constant 0 : index
      %47 = memref.load %arg5[%c0_28, %c0_29] : memref<1x1xf32, #tpu.memory_space<smem>>
      memref.store %27, %arg5[%c0_28, %c0_29] : memref<1x1xf32, #tpu.memory_space<smem>>
    } else {
    }
    %c1_i32 = arith.constant 1 : i32
    %13 = arith.cmpi eq, %arg0, %c1_i32 : i32
    %14 = arith.extui %13 : i1 to i32
    %c0_i32_7 = arith.constant 0 : i32
    %15 = arith.cmpi ne, %14, %c0_i32_7 : i32
    scf.if %15 {
      %c0 = arith.constant 0 : index
      %16 = memref.load %arg8[%c0] : memref<3xf32, #tpu.memory_space<smem>>
      %c1 = arith.constant 1 : index
      %17 = memref.load %arg8[%c1] : memref<3xf32, #tpu.memory_space<smem>>
      %c2 = arith.constant 2 : index
      %18 = memref.load %arg8[%c2] : memref<3xf32, #tpu.memory_space<smem>>
      %c0_8 = arith.constant 0 : index
      %c0_9 = arith.constant 0 : index
      %19 = vector.load %arg2[%c0_8, %c0_9] : memref<2x1024xf32, #tpu.memory_space<vmem>>, vector<2x1024xf32>
      %20 = vector.broadcast %18 : f32 to vector<2x1024xf32>
      %21 = arith.mulf %19, %20 : vector<2x1024xf32>
      %22 = math.roundeven %21 : vector<2x1024xf32>
      %23 = vector.broadcast %17 : f32 to vector<2x1024xf32>
      %24 = arith.addf %22, %23 : vector<2x1024xf32>
      %cst = arith.constant -1.280000e+02 : f32
      %cst_10 = arith.constant 1.270000e+02 : f32
      %25 = vector.broadcast %cst : f32 to vector<2x1024xf32>
      %26 = arith.maximumf %25, %24 : vector<2x1024xf32>
      %27 = vector.broadcast %cst_10 : f32 to vector<2x1024xf32>
      %28 = arith.minimumf %27, %26 : vector<2x1024xf32>
      %29 = vector.broadcast %17 : f32 to vector<2x1024xf32>
      %30 = arith.subf %28, %29 : vector<2x1024xf32>
      %31 = vector.broadcast %16 : f32 to vector<2x1024xf32>
      %32 = arith.mulf %30, %31 : vector<2x1024xf32>
      %c0_11 = arith.constant 0 : index
      %c0_12 = arith.constant 0 : index
      %33 = vector.load %arg3[%c0_11, %c0_12] : memref<2x1024xf32, #tpu.memory_space<vmem>>, vector<2x1024xf32>
      tpu.vector_store %arg3[%c0_11, %c0_12], %32 {strides = array<i32>} : memref<2x1024xf32, #tpu.memory_space<vmem>>, vector<2x1024xf32>,
    } else {
    }
    return
  }
  func.func @transform_0(%arg0: i32, %arg1: i32) -> (i32, i32) {
    %c0_i32 = arith.constant 0 : i32
    %c0_i32_0 = arith.constant 0 : i32
    return %arg1, %c0_i32 : i32, i32
  }
  func.func @transform_1(%arg0: i32, %arg1: i32) -> (i32, i32) {
    %0 = arith.muli %arg0, %arg1 : i32
    %c0_i32 = arith.constant 0 : i32
    %c0_i32_0 = arith.constant 0 : i32
    return %0, %c0_i32 : i32, i32
  }
  func.func @transform_2(%arg0: i32, %arg1: i32) -> (i32, i32) {
    %c0_i32 = arith.constant 0 : i32
    %c0_i32_0 = arith.constant 0 : i32
    %c0_i32_1 = arith.constant 0 : i32
    return %c0_i32, %c0_i32_0 : i32, i32
  }
  func.func @transform_3(%arg0: i32, %arg1: i32) -> (i32, i32) {
    %c0_i32 = arith.constant 0 : i32
    %c0_i32_0 = arith.constant 0 : i32
    %c0_i32_1 = arith.constant 0 : i32
    return %c0_i32, %c0_i32_0 : i32, i32
  }
}

</mosaic_0001>

<llo_original>
// kernel: quantize_affine_forward.1
$region0: #{quantize_affine_forward.1}
  #allocation0 [shape = 'u32[]', space=smem, size = 0x4, offset = 0x4, fixed_abs, tag = 'smem constant byte address 0x4 - core index']
  #allocation1 [shape = 'u32[144,128]{1,0:T(1,128)}', space=vmem, size = 0x12000, scoped, tag = 'internal scratch']
  #allocation2 [shape = 'f32[2,1024]{1,0:T(2,128)}', space=vmem, size = 0x2000, scoped, tag = 'scratch operand']
  #allocation3 [shape = 'f32[2,1024]{1,0:T(2,128)}', space=vmem, size = 0x2000, scoped, tag = 'scratch operand']
  #allocation4 [shape = 'f32[3]{0:T(128)}', space=smem, size = 0x200, scoped, tag = 'scratch operand']
  %s0 = inlined_call_operand.vmem [shape: f32[2,1024], index: 0, kind: input, shape index: {}]
  %s1 = inlined_call_operand.vmem [shape: f32[2,1024], index: 1, kind: output, shape index: {0}]
  %s2 = inlined_call_operand.hbm [shape: f32[1,1], index: 2, kind: output, shape index: {1}]
  %s3 = inlined_call_operand.hbm [shape: f32[1,1], index: 3, kind: output, shape index: {2}]
  %4 = xla_tuple %s1, %s2, %s3
  %s5 = sld [smem:[#allocation0]]
  $region69: #{quantize_affine_forward.1} parent=0
    _
  %s7 = ssub.s32 1, %s5
  %s8 = scalar_select 0, %s7, %s5
  $region1: #{quantize_affine_forward.1} parent=0
    #allocation5 [shape = 'u8[512]{0}', space=smem, size = 0x200, scoped, tag = 'output window, operand 1, single buffered']
    #allocation6 [shape = 's32[2]{0}', space=sflag, size = 0x8, scoped, tag = 'scoped memory for quantize_affine_forward.1']
    #allocation7 [shape = 'u8[512]{0}', space=smem, size = 0x200, scoped, tag = 'output window, operand 2, single buffered']
    #allocation8 [shape = 's32[1]{0}', space=sflag, size = 0x4, scoped, tag = 'scoped memory for quantize_affine_forward.1']
    %9 = vsyncpa [#allocation6], 0
    %10 = vsyncpa [#allocation8], 0
    loop: start=0, step=1, limit=4
    $region2: #{quantize_affine_forward.1} parent=1 // loop_pre_header
      _
    $region3: #{quantize_affine_forward.1} parent=1 // loop_header
      %s12 = sphi 0, %s16
      %p13 = scmp.ge.s32.totalorder %s12, 4
      %s19 = sphi 0, %s31
      %s20 = sphi 0, %s27
      %s21 = sphi 0, %s19
      %s22 = sphi 0, %s20
      %s23 = sphi 0, %s21
      %s24 = sphi 0, %s22
      %s34 = sphi 0, %s36
      %s37 = sphi 0, %s34
      %s38 = sphi 0, %s37
      %s54 = sphi 0, %s38
      %s62 = sphi 0, %s64
      %s65 = sphi 0, %s62
      %s66 = sphi 0, %s65
      %s82 = sphi 0, %s66
      %s86 = sphi 0, %s86
      %s88 = sphi 0, %s86
      %s89 = sphi 0, %s88
      %s103 = sphi 0, %s89
      %s107 = sphi 0, %s107
      %s109 = sphi 0, %s107
      %s110 = sphi 0, %s109
      %s124 = sphi 0, %s110
    $region4: #{quantize_affine_forward.1} parent=1 // loop_header_branch
      %15 = sbr.rel (%p13) target = $region8
    $region5: #{quantize_affine_forward.1} parent=1 // loop_body
      %s17 = ssub.s32 %s12, 1
      %s18 = ssub.s32 %s12, 2
      %s25 = sadd.s32 1, %s20
      %p26 = scmp.ge.s32.totalorder %s25, 1
      %s27 = scalar_select %p26, 0, %s25
      %s28 = sadd.s32 1, %s19
      %s29 = scalar_select %p26, %s28, %s19
      %p30 = scmp.ge.s32.totalorder %s29, 2
      %s31 = scalar_select %p30, 0, %s29
      %s32 = ssub.s32 %s20, %s27
      %p33 = scmp.eq.s32.totalorder %s32, 0
      %s35 = sadd.s32 %s34, 1
      %s36 = scalar_select %p33, %s34, %s35
      %p39 = pneg %p33
      %p40 = scmp.eq.s32.totalorder %s12, 1
      %p41 = por %p39, %p40
      %p42 = scmp.ne.s32.totalorder %s34, %s37
      %p43 = scmp.eq.s32.totalorder %s12, 0
      %p44 = por %p42, %p43
      %p45 = scmp.ne.s32.totalorder %s34, %s37
      %p46 = scmp.eq.s32.totalorder %s17, 1
      %p47 = por %p45, %p46
      %p48 = scmp.ne.s32.totalorder %s37, %s38
      %p49 = scmp.eq.s32.totalorder %s17, 0
      %p50 = por %p48, %p49
      %p51 = scmp.ne.s32.totalorder %s37, %s38
      %p52 = scmp.eq.s32.totalorder %s18, 1
      %p53 = por %p51, %p52
      %p55 = scmp.ne.s32.totalorder %s38, %s54
      %p56 = scmp.eq.s32.totalorder %s18, 0
      %p57 = por %p55, %p56
      %s58 = smul.u32 %s19, %s20
      %s59 = smul.u32 %s31, %s27
      %s60 = ssub.s32 %s58, %s59
      %p61 = scmp.eq.s32.totalorder %s60, 0
      %s63 = sadd.s32 %s62, 1
      %s64 = scalar_select %p61, %s62, %s63
      %p67 = pneg %p61
      %p68 = scmp.eq.s32.totalorder %s12, 1
      %p69 = por %p67, %p68
      %p70 = scmp.ne.s32.totalorder %s62, %s65
      %p71 = scmp.eq.s32.totalorder %s12, 0
      %p72 = por %p70, %p71
      %p73 = scmp.ne.s32.totalorder %s62, %s65
      %p74 = scmp.eq.s32.totalorder %s17, 1
      %p75 = por %p73, %p74
      %p76 = scmp.ne.s32.totalorder %s65, %s66
      %p77 = scmp.eq.s32.totalorder %s17, 0
      %p78 = por %p76, %p77
      %p79 = scmp.ne.s32.totalorder %s65, %s66
      %p80 = scmp.eq.s32.totalorder %s18, 1
      %p81 = por %p79, %p80
      %p83 = scmp.ne.s32.totalorder %s66, %s82
      %p84 = scmp.eq.s32.totalorder %s18, 0
      %p85 = por %p83, %p84
      %s87 = sadd.s32 %s86, 1
      %p90 = scmp.eq.s32.totalorder %s12, 1
      %p91 = scmp.ne.s32.totalorder %s86, %s88
      %p92 = scmp.eq.s32.totalorder %s12, 0
      %p93 = por %p91, %p92
      %p94 = scmp.ne.s32.totalorder %s86, %s88
      %p95 = scmp.eq.s32.totalorder %s17, 1
      %p96 = por %p94, %p95
      %p97 = scmp.ne.s32.totalorder %s88, %s89
      %p98 = scmp.eq.s32.totalorder %s17, 0
      %p99 = por %p97, %p98
      %p100 = scmp.ne.s32.totalorder %s88, %s89
      %p101 = scmp.eq.s32.totalorder %s18, 1
      %p102 = por %p100, %p101
      %p104 = scmp.ne.s32.totalorder %s89, %s103
      %p105 = scmp.eq.s32.totalorder %s18, 0
      %p106 = por %p104, %p105
      %s108 = sadd.s32 %s107, 1
      %p111 = scmp.eq.s32.totalorder %s12, 1
      %p112 = scmp.ne.s32.totalorder %s107, %s109
      %p113 = scmp.eq.s32.totalorder %s12, 0
      %p114 = por %p112, %p113
      %p115 = scmp.ne.s32.totalorder %s107, %s109
      %p116 = scmp.eq.s32.totalorder %s17, 1
      %p117 = por %p115, %p116
      %p118 = scmp.ne.s32.totalorder %s109, %s110
      %p119 = scmp.eq.s32.totalorder %s17, 0
      %p120 = por %p118, %p119
      %p121 = scmp.ne.s32.totalorder %s109, %s110
      %p122 = scmp.eq.s32.totalorder %s18, 1
      %p123 = por %p121, %p122
      %p125 = scmp.ne.s32.totalorder %s110, %s124
      %p126 = scmp.eq.s32.totalorder %s18, 0
      %p127 = por %p125, %p126
      %p128 = scmp.le.s32.totalorder 1, %s12
      %p129 = scmp.lt.s32.totalorder %s12, 3
      %p130 = pnand %p128, %p129
      %p131 = pneg %p130
      // Predicated region
      $region9: #{quantize_affine_forward.1} parent=5 // pred_check
        _
      $region10: #{quantize_affine_forward.1} parent=5 // pred_check_branch
        %133 = sbr.rel (%p130) target = $region12
      $region11: #{quantize_affine_forward.1} parent=5 // pred_region
        %s134 = ssub.s32 %s12, 1
        // Predicated region
        $region13: #{quantize_affine_forward.1} parent=11 // pred_check
          %p135 = pneg %p50
        $region14: #{quantize_affine_forward.1} parent=11 // pred_check_branch
          %137 = sbr.rel (%p135) target = $region16
        $region15: #{quantize_affine_forward.1} parent=11 // pred_region
          %p138 = scmp.lt.s32.totalorder %s22, 0
          %s139 = scalar_select %p138, %s22, 0
          %s140 = smul.addr %s139, 8
          %s141 = smul.addr %s140, 2
          %s142 = scalar_lea.vmem %s0, %s141
        $region16: #{quantize_affine_forward.1} parent=11 // pred_fallthru
          _
      $region12: #{quantize_affine_forward.1} parent=5 // pred_fallthru
        _
      %p143 = scmp.lt.s32.totalorder %s12, 2
      // Predicated region
      $region17: #{quantize_affine_forward.1} parent=5 // pred_check
        %p144 = pneg %p143
      $region18: #{quantize_affine_forward.1} parent=5 // pred_check_branch
        %146 = sbr.rel (%p144) target = $region20
      $region19: #{quantize_affine_forward.1} parent=5 // pred_region
        _
      $region20: #{quantize_affine_forward.1} parent=5 // pred_fallthru
        _
      %p147 = scmp.le.s32.totalorder 1, %s12
      %p148 = scmp.lt.s32.totalorder %s12, 3
      %p149 = pnand %p147, %p148
      %p150 = pneg %p149
      // Predicated region
      $region21: #{quantize_affine_forward.1} parent=5 // pred_check
        _
      $region22: #{quantize_affine_forward.1} parent=5 // pred_check_branch
        %152 = sbr.rel (%p149) target = $region24
      $region23: #{quantize_affine_forward.1} parent=5 // pred_region
        %s153 = ssub.s32 %s12, 1
        %p154 = scmp.lt.s32.totalorder %s22, 0
        %s155 = scalar_select %p154, %s22, 0
        %s156 = smul.addr %s155, 8
        %s157 = smul.addr %s156, 2
        %s158 = scalar_lea.vmem %s0, %s157
        %p159 = pneg %p50
        %p160 = pneg %p47
        %p161 = pneg %p78
        %p162 = pneg %p75
        %s163 = smul.u32 %s21, %s22
        %p164 = scmp.lt.s32.totalorder %s163, 0
        %s165 = scalar_select %p164, %s163, 0
        %s166 = smul.addr %s165, 8
        %s167 = smul.addr %s166, 2
        %s168 = scalar_lea.vmem %s1, %s167
        %p169 = pneg %p99
        %p170 = pneg %p96
        %p171 = pneg %p120
        %p172 = pneg %p117
        %p173 = scmp.lt.s32.totalorder %s22, 0
        %s174 = scalar_select %p173, %s22, 0
        %s175 = smul.addr %s174, 8
        %s176 = smul.addr %s175, 2
        %s177 = scalar_lea.vmem %s0, %s176
        %s178 = smul.u32 %s21, %s22
        %p179 = scmp.lt.s32.totalorder %s178, 0
        %s180 = scalar_select %p179, %s178, 0
        %s181 = smul.addr %s180, 8
        %s182 = smul.addr %s181, 2
        %s183 = scalar_lea.vmem %s1, %s182
        %s184 = smul.u32 %s21, %s22
        %p185 = scmp.eq.s32.totalorder %s21, 0
        %p186 = scmp.eq.s32.totalorder %s22, 0
        %p187 = pnand %p185, %p186
        %p188 = pneg %p187
        // Predicated region
        $region25: #{quantize_affine_forward.1} parent=23 // pred_check
          _
        $region26: #{quantize_affine_forward.1} parent=23 // pred_check_branch
          %190 = sbr.rel (%p187) target = $region28
        $region27: #{quantize_affine_forward.1} parent=23 // pred_region
          %191 = vst [vmem:[#allocation2] sm:$0xff] inf
          %192 = vst [vmem:[#allocation2 + $0x8] sm:$0xff] inf
          %193 = vst [vmem:[#allocation3] sm:$0xff] -inf
          %194 = vst [vmem:[#allocation3 + $0x8] sm:$0xff] -inf
        $region28: #{quantize_affine_forward.1} parent=23 // pred_fallthru
          _
        // Predicated region
        $region29: #{quantize_affine_forward.1} parent=23 // pred_check
          %p195 = pneg %p185
        $region30: #{quantize_affine_forward.1} parent=23 // pred_check_branch
          %197 = sbr.rel (%p195) target = $region32
        $region31: #{quantize_affine_forward.1} parent=23 // pred_region
          %v198 = vld [vmem:[%s177] sm:$0xff]
          %v199 = vld [vmem:[%s177 + $0x8] sm:$0xff]
          %v200 = vld [vmem:[#allocation2] sm:$0xff]
          %v201 = vld [vmem:[#allocation2 + $0x8] sm:$0xff]
          %v202 = vmin.f32 %v200, %v198
          %v203 = vmin.f32 %v201, %v199
          %204 = vst [vmem:[#allocation2] sm:$0xff] %v202
          %205 = vst [vmem:[#allocation2 + $0x8] sm:$0xff] %v203
          %v206 = vld [vmem:[#allocation3] sm:$0xff]
          %v207 = vld [vmem:[#allocation3 + $0x8] sm:$0xff]
          %v208 = vmax.f32 %v206, %v198
          %v209 = vmax.f32 %v207, %v199
          %210 = vst [vmem:[#allocation3] sm:$0xff] %v208
          %211 = vst [vmem:[#allocation3 + $0x8] sm:$0xff] %v209
        $region32: #{quantize_affine_forward.1} parent=23 // pred_fallthru
          _
        // Predicated region
        $region33: #{quantize_affine_forward.1} parent=23 // pred_check
          _
        $region34: #{quantize_affine_forward.1} parent=23 // pred_check_branch
          %213 = sbr.rel (%p187) target = $region36
        $region35: #{quantize_affine_forward.1} parent=23 // pred_region
          %v214 = vld [vmem:[#allocation2] sm:$0xff]
          %v215 = vld [vmem:[#allocation2 + $0x8] sm:$0xff]
          %v218 = vcombine.high %v214, %v214
          %v220 = vunpack.c.l.s4 1983009808
          %v221 = vunpack.c.0.s8 %v220
          %v222 = vlaneseq
          %v223 = vshrl.u32 %v222, 7
          %v224 = vsub.s32 %v221, %v223
          %v225 = vrot.slane %v214, %v224
          %v227 = vunpack.c.l.s4 1983009808
          %v228 = vunpack.c.0.s8 %v227
          %v229 = vlaneseq
          %v230 = vshrl.u32 %v229, 7
          %v231 = vsub.s32 %v228, %v230
          %v232 = vrot.slane %v218, %v231
          %v233 = vcombine.high %v225, %v225
          %v234 = vcombine.high %v232, %v232
          %v235 = vcombine.high %v215, %v215
          %v237 = vunpack.c.l.s4 1983009808
          %v238 = vunpack.c.0.s8 %v237
          %v239 = vlaneseq
          %v240 = vshrl.u32 %v239, 7
          %v241 = vsub.s32 %v238, %v240
          %v242 = vrot.slane %v215, %v241
          %v244 = vunpack.c.l.s4 1983009808
          %v245 = vunpack.c.0.s8 %v244
          %v246 = vlaneseq
          %v247 = vshrl.u32 %v246, 7
          %v248 = vsub.s32 %v245, %v247
          %v249 = vrot.slane %v235, %v248
          %v250 = vcombine.high %v242, %v242
          %v251 = vcombine.high %v249, %v249
          %vm260 = vcmask 1041408
          %v261 = vsel %vm260, %v225, inf
          %v262 = vsel %vm260, %v233, inf
          %v263 = vsel %vm260, %v232, inf
          %v264 = vsel %vm260, %v234, inf
          %v265 = vsel %vm260, %v242, inf
          %v266 = vmin.f32 %v261, %v265
          %v267 = vsel %vm260, %v250, inf
          %v268 = vmin.f32 %v262, %v267
          %v269 = vsel %vm260, %v249, inf
          %v270 = vmin.f32 %v263, %v269
          %v271 = vsel %vm260, %v251, inf
          %v272 = vmin.f32 %v264, %v271
          %v273 = vmin.f32 %v266, %v268
          %v274 = vmin.f32 %v270, %v272
          %v275 = vmin.f32 %v273, %v274
          %276 = vmin.xlane.f32.xlu0 %v275
          %v277 = vpop.xlane.xlu0 %276
          %v278 = vrot.slane %v277, 4
          %v279 = vmin.f32 %v277, %v278
          %v280 = vrot.slane %v279, 2
          %v281 = vmin.f32 %v279, %v280
          %v282 = vrot.slane %v281, 1
          %v283 = vmin.f32 %v281, %v282
          %s284 = vtos %v283
          %s285 = smin.f32 %s284, 0.0
          %v286 = vld [vmem:[#allocation3] sm:$0xff]
          %v287 = vld [vmem:[#allocation3 + $0x8] sm:$0xff]
          %v290 = vcombine.high %v286, %v286
          %v292 = vunpack.c.l.s4 1983009808
          %v293 = vunpack.c.0.s8 %v292
          %v294 = vlaneseq
          %v295 = vshrl.u32 %v294, 7
          %v296 = vsub.s32 %v293, %v295
          %v297 = vrot.slane %v286, %v296
          %v299 = vunpack.c.l.s4 1983009808
          %v300 = vunpack.c.0.s8 %v299
          %v301 = vlaneseq
          %v302 = vshrl.u32 %v301, 7
          %v303 = vsub.s32 %v300, %v302
          %v304 = vrot.slane %v290, %v303
          %v305 = vcombine.high %v297, %v297
          %v306 = vcombine.high %v304, %v304
          %v307 = vcombine.high %v287, %v287
          %v309 = vunpack.c.l.s4 1983009808
          %v310 = vunpack.c.0.s8 %v309
          %v311 = vlaneseq
          %v312 = vshrl.u32 %v311, 7
          %v313 = vsub.s32 %v310, %v312
          %v314 = vrot.slane %v287, %v313
          %v316 = vunpack.c.l.s4 1983009808
          %v317 = vunpack.c.0.s8 %v316
          %v318 = vlaneseq
          %v319 = vshrl.u32 %v318, 7
          %v320 = vsub.s32 %v317, %v319
          %v321 = vrot.slane %v307, %v320
          %v322 = vcombine.high %v314, %v314
          %v323 = vcombine.high %v321, %v321
          %v332 = vsel %vm260, %v297, -inf
          %v333 = vsel %vm260, %v305, -inf
          %v334 = vsel %vm260, %v304, -inf
          %v335 = vsel %vm260, %v306, -inf
          %v336 = vsel %vm260, %v314, -inf
          %v337 = vmax.f32 %v332, %v336
          %v338 = vsel %vm260, %v322, -inf
          %v339 = vmax.f32 %v333, %v338
          %v340 = vsel %vm260, %v321, -inf
          %v341 = vmax.f32 %v334, %v340
          %v342 = vsel %vm260, %v323, -inf
          %v343 = vmax.f32 %v335, %v342
          %v344 = vmax.f32 %v337, %v339
          %v345 = vmax.f32 %v341, %v343
          %v346 = vmax.f32 %v344, %v345
          %347 = vmax.xlane.f32.xlu0 %v346
          %v348 = vpop.xlane.xlu0 %347
          %v349 = vrot.slane %v348, 4
          %v350 = vmax.f32 %v348, %v349
          %v351 = vrot.slane %v350, 2
          %v352 = vmax.f32 %v350, %v351
          %v353 = vrot.slane %v352, 1
          %v354 = vmax.f32 %v352, %v353
          %s355 = vtos %v354
          %s356 = smax.f32 %s355, 0.0
          %p357 = scmp.eq.f32.partialorder %s285, 0.0
          %p358 = scmp.eq.f32.partialorder %s356, 0.0
          %p359 = pnand %p357, %p358
          %p360 = pneg %p359
          %s361 = ssub.f32 %s356, %s285
          %v362 = vrcp.pop 255.0
          %s363 = vtos %v362
          %s364 = smul.f32 %s361, %s363
          %s365 = scalar_select %p360, 1.0, %s364
          %v366 = vstv %s365
          %v367 = vrcp.pop %v366
          %s368 = vtos %v367
          %s369 = smul.f32 %s285, %s368
          %s370 = ssub.f32 -128.0, %s369
          %s371 = scvt.f32.s32 %s370
          %s372 = scvt.s32.f32 %s371
          %s373 = sand.u32 2147483647, %s372
          %s374 = sand.u32 %s370, 2147483648
          %s375 = sor.u32 %s373, %s374
          %s376 = sand.u32 2147483647, %s370
          %p377 = scmp.lt.f32.partialorder %s376, 2.1474836e+09
          %s378 = scalar_select %p377, %s375, %s370
          %s379 = smax.f32 %s378, -128.0
          %s380 = smin.f32 %s379, 127.0
          %s381 = scalar_select %p360, 0.0, %s364
          %s382 = scalar_lea.smem [#allocation4], 0
          %383 = sst [smem:[%s382]] %s381
          %s384 = scalar_select %p360, 0.0, %s380
          %s385 = scalar_lea.smem [#allocation4], 1
          %386 = sst [smem:[%s385]] %s384
          %v387 = vstv %s365
          %v388 = vrcp.pop %v387
          %s389 = vtos %v388
          %s390 = scalar_select %p360, 0.0, %s389
          %s391 = scalar_lea.smem [#allocation4], 2
          %392 = sst [smem:[%s391]] %s390
          %s393 = scalar_lea.smem [#allocation5], 0
          %394 = sst [smem:[%s393]] %s285
          %s395 = scalar_lea.smem [#allocation7], 0
          %396 = sst [smem:[%s395]] %s356
        $region36: #{quantize_affine_forward.1} parent=23 // pred_fallthru
          _
        %p397 = scmp.eq.s32.totalorder %s21, 1
        // Predicated region
        $region37: #{quantize_affine_forward.1} parent=23 // pred_check
          %p398 = pneg %p397
        $region38: #{quantize_affine_forward.1} parent=23 // pred_check_branch
          %400 = sbr.rel (%p398) target = $region40
        $region39: #{quantize_affine_forward.1} parent=23 // pred_region
          %s401 = sld [smem:[#allocation4]]
          %s402 = sld [smem:[#allocation4 + $0x1]]
          %s403 = sld [smem:[#allocation4 + $0x2]]
          %v404 = vld [vmem:[%s177] sm:$0xff]
          %v405 = vld [vmem:[%s177 + $0x8] sm:$0xff]
          %v406 = vstv %s403
          %v407 = vmul.f32 %v404, %v406
          %v408 = vmul.f32 %v405, %v406
          %v409 = vround.ne.pseudo %v407
          %v410 = vround.ne.pseudo %v408
          %v411 = vstv %s402
          %v412 = vadd.f32 %v409, %v411
          %v413 = vadd.f32 %v410, %v411
          %v414 = vmax.f32 %v412, -128.0
          %v415 = vmax.f32 %v413, -128.0
          %v416 = vmin.f32 %v414, 127.0
          %v417 = vmin.f32 %v415, 127.0
          %v418 = vsub.f32 %v416, %v411
          %v419 = vsub.f32 %v417, %v411
          %v420 = vstv %s401
          %v421 = vmul.f32 %v418, %v420
          %v422 = vmul.f32 %v419, %v420
          %423 = vst [vmem:[%s183] sm:$0xff] %v421
          %424 = vst [vmem:[%s183 + $0x8] sm:$0xff] %v422
        $region40: #{quantize_affine_forward.1} parent=23 // pred_fallthru
          _
        %s425 = smul.u32 %s21, %s22
        %p426 = scmp.lt.s32.totalorder %s425, 0
        %s427 = scalar_select %p426, %s425, 0
        %s428 = smul.addr %s427, 8
        %s429 = smul.addr %s428, 2
        %s430 = scalar_lea.vmem %s1, %s429
        // Predicated region
        $region41: #{quantize_affine_forward.1} parent=23 // pred_check
          %p431 = pneg %p75
        $region42: #{quantize_affine_forward.1} parent=23 // pred_check_branch
          %433 = sbr.rel (%p431) target = $region44
        $region43: #{quantize_affine_forward.1} parent=23 // pred_region
          %s434 = smul.u32 %s21, %s22
        $region44: #{quantize_affine_forward.1} parent=23 // pred_fallthru
          _
        // Predicated region
        $region45: #{quantize_affine_forward.1} parent=23 // pred_check
          %p435 = pneg %p96
        $region46: #{quantize_affine_forward.1} parent=23 // pred_check_branch
          %437 = sbr.rel (%p435) target = $region48
        $region47: #{quantize_affine_forward.1} parent=23 // pred_region
          %s439 = ssub.s32 16, 16
          %440 = vsyncadd [#allocation6], %s439
          %443 = dma.smem_to_hbm [#allocation5], 16, %s2, [#allocation6]
        $region48: #{quantize_affine_forward.1} parent=23 // pred_fallthru
          _
        // Predicated region
        $region49: #{quantize_affine_forward.1} parent=23 // pred_check
          %p444 = pneg %p117
        $region50: #{quantize_affine_forward.1} parent=23 // pred_check_branch
          %446 = sbr.rel (%p444) target = $region52
        $region51: #{quantize_affine_forward.1} parent=23 // pred_region
          %s448 = ssub.s32 16, 16
          %449 = vsyncadd [#allocation8], %s448
          %452 = dma.smem_to_hbm [#allocation7], 16, %s3, [#allocation8]
        $region52: #{quantize_affine_forward.1} parent=23 // pred_fallthru
          _
        // Predicated region
        $region53: #{quantize_affine_forward.1} parent=23 // pred_check
          %p453 = pneg %p96
        $region54: #{quantize_affine_forward.1} parent=23 // pred_check_branch
          %455 = sbr.rel (%p453) target = $region56
        $region55: #{quantize_affine_forward.1} parent=23 // pred_region
          %456 = dma.done [#allocation6], 16
        $region56: #{quantize_affine_forward.1} parent=23 // pred_fallthru
          _
        // Predicated region
        $region57: #{quantize_affine_forward.1} parent=23 // pred_check
          %p457 = pneg %p117
        $region58: #{quantize_affine_forward.1} parent=23 // pred_check_branch
          %459 = sbr.rel (%p457) target = $region60
        $region59: #{quantize_affine_forward.1} parent=23 // pred_region
          %460 = dma.done [#allocation8], 16
        $region60: #{quantize_affine_forward.1} parent=23 // pred_fallthru
          _
        %461 = sfence
      $region24: #{quantize_affine_forward.1} parent=5 // pred_fallthru
        _
      %p462 = scmp.le.s32.totalorder 2, %s12
      // Predicated region
      $region61: #{quantize_affine_forward.1} parent=5 // pred_check
        %p463 = pneg %p462
      $region62: #{quantize_affine_forward.1} parent=5 // pred_check_branch
        %465 = sbr.rel (%p463) target = $region64
      $region63: #{quantize_affine_forward.1} parent=5 // pred_region
        %s466 = ssub.s32 %s12, 2
        // Predicated region
        $region65: #{quantize_affine_forward.1} parent=63 // pred_check
          %p467 = pneg %p81
        $region66: #{quantize_affine_forward.1} parent=63 // pred_check_branch
          %469 = sbr.rel (%p467) target = $region68
        $region67: #{quantize_affine_forward.1} parent=63 // pred_region
          %s470 = smul.u32 %s23, %s24
          %p471 = scmp.lt.s32.totalorder %s470, 0
          %s472 = scalar_select %p471, %s470, 0
          %s473 = smul.addr %s472, 8
          %s474 = smul.addr %s473, 2
          %s475 = scalar_lea.vmem %s1, %s474
        $region68: #{quantize_affine_forward.1} parent=63 // pred_fallthru
          _
      $region64: #{quantize_affine_forward.1} parent=5 // pred_fallthru
        _
    $region6: #{quantize_affine_forward.1} parent=1 // loop_footer
      %s16 = sadd.s32 1, %s12
    $region7: #{quantize_affine_forward.1} parent=1 // loop_footer_branch
      %11 = sbr.rel target = $region3
    $region8: #{quantize_affine_forward.1} parent=1 // loop_exit
      _
    %476 = vsyncpa [#allocation6], 1
    %s477 = scalar_lea.sflag [#allocation6], 1
    %478 = vsyncpa %s477, 1
    %479 = vsyncpa [#allocation8], 1

</llo_original>
